<compile_context>
chip_gen: v5e
topology: v5e:2x2
jax: 0.10.0
libtpu: 0.0.40
codegen_flags: <defaults>
</compile_context>

<pallas_src>
import jax
import jax.numpy as jnp
from jax.experimental import pallas as pl
from jax.experimental.pallas import tpu as pltpu

_LANE = 128


def _round_up(n, m):
    return ((n + m - 1) // m) * m


def critique_kernel(x_ref, w1_ref, b1_ref, w2_ref, b2_ref, w3_ref, b3_ref, out_ref):
    # x_ref : (1, M)   l-major flattened positions of this batch tile, M = tb*L
    # w1_ref, b1_ref : (H, 1)   w2_ref : (20, H)   b2_ref : (20, 1)
    # w3_ref : (1, 20)          b3_ref : (1, 1) scalar in SMEM
    # out_ref: (1, tb)  lane-dense per-batch-row sums
    tb = out_ref.shape[-1]
    m = x_ref.shape[-1]
    seq_len = m // tb

    x = x_ref[...]                                                    # (1, M)

    # fc1 (Conv1d(1,H,1)) + ReLU: channels on sublanes, positions on lanes.
    h1 = jnp.maximum(w1_ref[...] * x + b1_ref[...], 0.0)              # (H, M)

    # fc2 (Conv1d(H,20,1)) + ReLU: single MXU matmul over all tb*L positions.
    h2 = jnp.maximum(
        jnp.dot(w2_ref[...], h1, preferred_element_type=jnp.float32)
        + b2_ref[...],
        0.0,
    )                                                                  # (20, M)

    # fc3 (Conv1d(20,1,1)): (1,20) @ (20,M) -> lane-dense row of per-position values.
    y = jnp.dot(w3_ref[...], h2, preferred_element_type=jnp.float32)   # (1, M)

    # torch .sum(dim=2): positions are l-major, so batch row t's contributions sit
    # at the lane-aligned slices y[:, l*tb:(l+1)*tb].  Pairwise tree (depth log2(L))
    # of tiny (1, tb) vreg adds — no relayout, no serial L-deep chain.
    parts = [y[:, l * tb:(l + 1) * tb] for l in range(seq_len)]
    while len(parts) > 1:
        nxt = [parts[i] + parts[i + 1] for i in range(0, len(parts) - 1, 2)]
        if len(parts) % 2:
            nxt.append(parts[-1])
        parts = nxt

    # fc3 bias hoisted: add L * b3 once per batch row (scalar read from SMEM).
    out_ref[...] = parts[0] + jnp.float32(seq_len) * b3_ref[0, 0]


def _choose_tb(batch, seq_len):
    # Bytes per flattened position (f32, sublane-padded):
    #   x (double-buffered (1,M) pads to 8 sublanes) 2*8*4 =  64
    #   h1 (H=32 rows)                               32*4  = 128
    #   h2 (20 rows, pads to 24)                     24*4  =  96
    #   y + temporaries                             ~16*4  =  96
    bytes_per_pos = 384
    budget = 10 * 1024 * 1024   # well under v5e's 16 MiB / v6e,v7x 32 MiB scoped defaults
    cap = max(_LANE, (budget // (bytes_per_pos * max(seq_len, 1))) // _LANE * _LANE)
    n128 = _round_up(max(batch, 1), _LANE) // _LANE
    tb = max(_LANE, max(n128 // 2, 1) * _LANE)   # >= 2 tiles when batch allows (v7x dual TC)
    return min(tb, 1024, cap)


def critique_forward(x, w1, b1, w2, b2, w3, b3, *, tb=None):
    """x: (B, L); w1,b1: (H,1); w2: (20,H); b2: (20,1); w3: (1,20); b3: (1,1)."""
    B, L = x.shape
    H = w1.shape[0]

    if tb is None:
        tb = _choose_tb(B, L)
    else:
        tb = _round_up(max(tb, 1), _LANE)   # keep stores / in-kernel slices lane-aligned
    b_pad = _round_up(B, tb)
    nb = b_pad // tb
    m = tb * L

    if b_pad != B:
        x = jnp.pad(x, ((0, b_pad - B), (0, 0)))   # zero rows, sliced off below

    # l-major rearrangement: x_lm[b, 0, l*tb + t] = x[b*tb + t, l].  One cheap XLA
    # transpose outside the kernel buys lane-aligned position groups inside it.
    x_lm = x.reshape(nb, tb, L).transpose(0, 2, 1).reshape(nb, 1, m)

    out = pl.pallas_call(
        critique_kernel,
        out_shape=jax.ShapeDtypeStruct((nb, 1, tb), jnp.float32),
        grid_spec=pltpu.PrefetchScalarGridSpec(
            num_scalar_prefetch=0,
            grid=(nb,),
            in_specs=[
                pl.BlockSpec((None, 1, m), lambda bi: (bi, 0, 0)),   # x tile, lane-dense
                pl.BlockSpec((H, 1), lambda bi: (0, 0)),             # w1 (VMEM-resident)
                pl.BlockSpec((H, 1), lambda bi: (0, 0)),             # b1
                pl.BlockSpec((20, H), lambda bi: (0, 0)),            # W2
                pl.BlockSpec((20, 1), lambda bi: (0, 0)),            # b2
                pl.BlockSpec((1, 20), lambda bi: (0, 0)),            # w3
                pl.BlockSpec(memory_space=pltpu.MemorySpace.SMEM),   # b3 scalar
            ],
            out_specs=pl.BlockSpec((None, 1, tb), lambda bi: (bi, 0, 0)),
        ),
        compiler_params=pltpu.CompilerParams(
            dimension_semantics=("parallel",),
            vmem_limit_bytes=32 * 1024 * 1024,
        ),
    )(x_lm, w1, b1, w2, b2, w3, b3)

    return out.reshape(b_pad, 1)[:B]


def critique_reference(x, w1, b1, w2, b2, w3, b3):
    hp = jax.lax.Precision.HIGHEST
    h1 = jnp.maximum(w1[None] * x[:, None, :] + b1[None], 0.0)                      # (B,H,L)
    h2 = jnp.maximum(jnp.einsum("oh,bhl->bol", w2, h1, precision=hp) + b2[None], 0.0)  # (B,20,L)
    h3 = jnp.einsum("oc,bcl->bol", w3, h2, precision=hp) + b3[None]                  # (B,1,L)
    return h3.sum(axis=2)                                                             # (B,1)


def init_params(key, hidden_size):
    """Deterministic synthetic init mirroring the torch module's shapes.

    Weights: xavier_uniform_ (as in __init__); biases: default Conv1d
    U(-1/sqrt(fan_in), 1/sqrt(fan_in)).
    """
    H = hidden_size
    k1, k2, k3, k4, k5, k6 = jax.random.split(key, 6)
    bnd1 = (6.0 / (1 + H)) ** 0.5      # fc1 weight: torch shape (H, 1, 1)
    bnd2 = (6.0 / (H + 20)) ** 0.5     # fc2 weight: torch shape (20, H, 1)
    bnd3 = (6.0 / (20 + 1)) ** 0.5     # fc3 weight: torch shape (1, 20, 1)
    w1 = jax.random.uniform(k1, (H, 1), jnp.float32, -bnd1, bnd1)
    b1 = jax.random.uniform(k2, (H, 1), jnp.float32, -1.0, 1.0)               # fan_in = 1
    w2 = jax.random.uniform(k3, (20, H), jnp.float32, -bnd2, bnd2)
    b2 = jax.random.uniform(k4, (20, 1), jnp.float32, -1.0 / H ** 0.5, 1.0 / H ** 0.5)
    w3 = jax.random.uniform(k5, (1, 20), jnp.float32, -bnd3, bnd3)
    b3 = jax.random.uniform(k6, (1, 1), jnp.float32, -1.0 / 20 ** 0.5, 1.0 / 20 ** 0.5)
    return w1, b1, w2, b2, w3, b3


if __name__ == "__main__":
    B, L, H = 2, 16, 32
    key = jax.random.PRNGKey(0)
    pkey, xkey, xkey2 = jax.random.split(key, 3)
    params = init_params(pkey, H)

    x = jax.random.normal(xkey, (B, L), dtype=jnp.float32)
    out = jax.block_until_ready(critique_forward(x, *params))
    ref = critique_reference(x, *params)
    assert out.shape == (B, 1)
    assert jnp.allclose(out, ref, rtol=2e-3, atol=2e-3), (out, ref)

    # Multi-tile + padded-batch path: 3 grid steps of tb=128, 84 padded rows sliced off.
    x2 = jax.random.normal(xkey2, (300, L), dtype=jnp.float32)
    out2 = jax.block_until_ready(critique_forward(x2, *params, tb=128))
    ref2 = critique_reference(x2, *params)
    assert out2.shape == (300, 1)
    assert jnp.allclose(out2, ref2, rtol=2e-3, atol=2e-3), (out2, ref2)

    print("KERNEL_OK")
</pallas_src>

<mosaic_0001>
module attributes {stable_mosaic.version = 11 : i64} {
  func.func @critique_kernel(%arg0: i32, %arg1: memref<1x1x2048xf32, #tpu.memory_space<vmem>>, %arg2: memref<32x1xf32, #tpu.memory_space<vmem>>, %arg3: memref<32x1xf32, #tpu.memory_space<vmem>>, %arg4: memref<20x32xf32, #tpu.memory_space<vmem>>, %arg5: memref<20x1xf32, #tpu.memory_space<vmem>>, %arg6: memref<1x20xf32, #tpu.memory_space<vmem>>, %arg7: memref<1x1xf32, #tpu.memory_space<smem>>, %arg8: memref<1x1x128xf32, #tpu.memory_space<vmem>>) attributes {dimension_semantics = [#tpu.dimension_semantics<parallel>], iteration_bounds = array<i64: 1>, scalar_prefetch = 0 : i64, scratch_operands = 0 : i64, tpu.core_type = #tpu.core_type<tc>, window_params = [{transform_indices = @transform_0, window_bounds = array<i64: 1, 1, 2048>}, {pipeline_mode = #tpu.pipeline_mode<synchronous>, transform_indices = @transform_1, window_bounds = array<i64: 32, 1>}, {pipeline_mode = #tpu.pipeline_mode<synchronous>, transform_indices = @transform_2, window_bounds = array<i64: 32, 1>}, {pipeline_mode = #tpu.pipeline_mode<synchronous>, transform_indices = @transform_3, window_bounds = array<i64: 20, 32>}, {pipeline_mode = #tpu.pipeline_mode<synchronous>, transform_indices = @transform_4, window_bounds = array<i64: 20, 1>}, {pipeline_mode = #tpu.pipeline_mode<synchronous>, transform_indices = @transform_5, window_bounds = array<i64: 1, 20>}, {transform_indices = @transform_6, window_bounds = array<i64: 1, 1>}, {transform_indices = @transform_7, window_bounds = array<i64: 1, 1, 128>}]} {
    %c0 = arith.constant 0 : index
    %c0_0 = arith.constant 0 : index
    %c0_1 = arith.constant 0 : index
    %0 = vector.load %arg1[%c0, %c0_0, %c0_1] : memref<1x1x2048xf32, #tpu.memory_space<vmem>>, vector<1x1x2048xf32>
    %1 = vector.shape_cast %0 : vector<1x1x2048xf32> to vector<1x2048xf32>
    %c0_2 = arith.constant 0 : index
    %c0_3 = arith.constant 0 : index
    %2 = vector.load %arg2[%c0_2, %c0_3] : memref<32x1xf32, #tpu.memory_space<vmem>>, vector<32x1xf32>
    %3 = vector.broadcast %2 : vector<32x1xf32> to vector<32x2048xf32>
    %4 = vector.broadcast %1 : vector<1x2048xf32> to vector<32x2048xf32>
    %5 = arith.mulf %3, %4 : vector<32x2048xf32>
    %c0_4 = arith.constant 0 : index
    %c0_5 = arith.constant 0 : index
    %6 = vector.load %arg3[%c0_4, %c0_5] : memref<32x1xf32, #tpu.memory_space<vmem>>, vector<32x1xf32>
    %7 = vector.broadcast %6 : vector<32x1xf32> to vector<32x2048xf32>
    %8 = arith.addf %5, %7 : vector<32x2048xf32>
    %cst = arith.constant 0.000000e+00 : f32
    %9 = vector.broadcast %cst : f32 to vector<32x2048xf32>
    %10 = arith.maximumf %8, %9 : vector<32x2048xf32>
    %c0_6 = arith.constant 0 : index
    %c0_7 = arith.constant 0 : index
    %11 = vector.load %arg4[%c0_6, %c0_7] : memref<20x32xf32, #tpu.memory_space<vmem>>, vector<20x32xf32>
    %cst_8 = arith.constant dense<0.000000e+00> : vector<20x2048xf32>
    %12 = tpu.matmul %11, %10, %cst_8 {dimension_numbers = #tpu.dot_dimension_numbers<[1], [0], [0], [1], [0, 0, 1, 1], [], []>} : vector<20x32xf32>, vector<32x2048xf32>, vector<20x2048xf32> -> vector<20x2048xf32>
    %c0_9 = arith.constant 0 : index
    %c0_10 = arith.constant 0 : index
    %13 = vector.load %arg5[%c0_9, %c0_10] : memref<20x1xf32, #tpu.memory_space<vmem>>, vector<20x1xf32>
    %14 = vector.broadcast %13 : vector<20x1xf32> to vector<20x2048xf32>
    %15 = arith.addf %12, %14 : vector<20x2048xf32>
    %cst_11 = arith.constant 0.000000e+00 : f32
    %16 = vector.broadcast %cst_11 : f32 to vector<20x2048xf32>
    %17 = arith.maximumf %15, %16 : vector<20x2048xf32>
    %c0_12 = arith.constant 0 : index
    %c0_13 = arith.constant 0 : index
    %18 = vector.load %arg6[%c0_12, %c0_13] : memref<1x20xf32, #tpu.memory_space<vmem>>, vector<1x20xf32>
    %cst_14 = arith.constant dense<0.000000e+00> : vector<1x2048xf32>
    %19 = tpu.matmul %18, %17, %cst_14 {dimension_numbers = #tpu.dot_dimension_numbers<[1], [0], [0], [1], [0, 0, 1, 1], [], []>} : vector<1x20xf32>, vector<20x2048xf32>, vector<1x2048xf32> -> vector<1x2048xf32>
    %20 = vector.extract_strided_slice %19 {offsets = [0, 0], sizes = [1, 128], strides = [1, 1]} : vector<1x2048xf32> to vector<1x128xf32>
    %21 = vector.extract_strided_slice %19 {offsets = [0, 128], sizes = [1, 128], strides = [1, 1]} : vector<1x2048xf32> to vector<1x128xf32>
    %22 = vector.extract_strided_slice %19 {offsets = [0, 256], sizes = [1, 128], strides = [1, 1]} : vector<1x2048xf32> to vector<1x128xf32>
    %23 = vector.extract_strided_slice %19 {offsets = [0, 384], sizes = [1, 128], strides = [1, 1]} : vector<1x2048xf32> to vector<1x128xf32>
    %24 = vector.extract_strided_slice %19 {offsets = [0, 512], sizes = [1, 128], strides = [1, 1]} : vector<1x2048xf32> to vector<1x128xf32>
    %25 = vector.extract_strided_slice %19 {offsets = [0, 640], sizes = [1, 128], strides = [1, 1]} : vector<1x2048xf32> to vector<1x128xf32>
    %26 = vector.extract_strided_slice %19 {offsets = [0, 768], sizes = [1, 128], strides = [1, 1]} : vector<1x2048xf32> to vector<1x128xf32>
    %27 = vector.extract_strided_slice %19 {offsets = [0, 896], sizes = [1, 128], strides = [1, 1]} : vector<1x2048xf32> to vector<1x128xf32>
    %28 = vector.extract_strided_slice %19 {offsets = [0, 1024], sizes = [1, 128], strides = [1, 1]} : vector<1x2048xf32> to vector<1x128xf32>
    %29 = vector.extract_strided_slice %19 {offsets = [0, 1152], sizes = [1, 128], strides = [1, 1]} : vector<1x2048xf32> to vector<1x128xf32>
    %30 = vector.extract_strided_slice %19 {offsets = [0, 1280], sizes = [1, 128], strides = [1, 1]} : vector<1x2048xf32> to vector<1x128xf32>
    %31 = vector.extract_strided_slice %19 {offsets = [0, 1408], sizes = [1, 128], strides = [1, 1]} : vector<1x2048xf32> to vector<1x128xf32>
    %32 = vector.extract_strided_slice %19 {offsets = [0, 1536], sizes = [1, 128], strides = [1, 1]} : vector<1x2048xf32> to vector<1x128xf32>
    %33 = vector.extract_strided_slice %19 {offsets = [0, 1664], sizes = [1, 128], strides = [1, 1]} : vector<1x2048xf32> to vector<1x128xf32>
    %34 = vector.extract_strided_slice %19 {offsets = [0, 1792], sizes = [1, 128], strides = [1, 1]} : vector<1x2048xf32> to vector<1x128xf32>
    %35 = vector.extract_strided_slice %19 {offsets = [0, 1920], sizes = [1, 128], strides = [1, 1]} : vector<1x2048xf32> to vector<1x128xf32>
    %36 = arith.addf %20, %21 : vector<1x128xf32>
    %37 = arith.addf %22, %23 : vector<1x128xf32>
    %38 = arith.addf %24, %25 : vector<1x128xf32>
    %39 = arith.addf %26, %27 : vector<1x128xf32>
    %40 = arith.addf %28, %29 : vector<1x128xf32>
    %41 = arith.addf %30, %31 : vector<1x128xf32>
    %42 = arith.addf %32, %33 : vector<1x128xf32>
    %43 = arith.addf %34, %35 : vector<1x128xf32>
    %44 = arith.addf %36, %37 : vector<1x128xf32>
    %45 = arith.addf %38, %39 : vector<1x128xf32>
    %46 = arith.addf %40, %41 : vector<1x128xf32>
    %47 = arith.addf %42, %43 : vector<1x128xf32>
    %48 = arith.addf %44, %45 : vector<1x128xf32>
    %49 = arith.addf %46, %47 : vector<1x128xf32>
    %50 = arith.addf %48, %49 : vector<1x128xf32>
    %c0_15 = arith.constant 0 : index
    %c0_16 = arith.constant 0 : index
    %51 = memref.load %arg7[%c0_15, %c0_16] : memref<1x1xf32, #tpu.memory_space<smem>>
    %cst_17 = arith.constant 1.600000e+01 : f32
    %52 = arith.mulf %cst_17, %51 : f32
    %53 = vector.broadcast %52 : f32 to vector<1x128xf32>
    %54 = arith.addf %50, %53 : vector<1x128xf32>
    %c0_18 = arith.constant 0 : index
    %c0_19 = arith.constant 0 : index
    %c0_20 = arith.constant 0 : index
    %55 = vector.load %arg8[%c0_18, %c0_19, %c0_20] : memref<1x1x128xf32, #tpu.memory_space<vmem>>, vector<1x1x128xf32>
    %56 = vector.shape_cast %55 : vector<1x1x128xf32> to vector<1x128xf32>
    %57 = vector.shape_cast %54 : vector<1x128xf32> to vector<1x1x128xf32>
    tpu.vector_store %arg8[%c0_18, %c0_19, %c0_20], %57 {strides = array<i32>} : memref<1x1x128xf32, #tpu.memory_space<vmem>>, vector<1x1x128xf32>,
    return
  }
  func.func @transform_0(%arg0: i32) -> (i32, i32, i32) {
    %c0_i32 = arith.constant 0 : i32
    %c0_i32_0 = arith.constant 0 : i32
    %c0_i32_1 = arith.constant 0 : i32
    return %arg0, %c0_i32, %c0_i32_0 : i32, i32, i32
  }
  func.func @transform_1(%arg0: i32) -> (i32, i32) {
    %c0_i32 = arith.constant 0 : i32
    %c0_i32_0 = arith.constant 0 : i32
    %c0_i32_1 = arith.constant 0 : i32
    return %c0_i32, %c0_i32_0 : i32, i32
  }
  func.func @transform_2(%arg0: i32) -> (i32, i32) {
    %c0_i32 = arith.constant 0 : i32
    %c0_i32_0 = arith.constant 0 : i32
    %c0_i32_1 = arith.constant 0 : i32
    return %c0_i32, %c0_i32_0 : i32, i32
  }
  func.func @transform_3(%arg0: i32) -> (i32, i32) {
    %c0_i32 = arith.constant 0 : i32
    %c0_i32_0 = arith.constant 0 : i32
    %c0_i32_1 = arith.constant 0 : i32
    return %c0_i32, %c0_i32_0 : i32, i32
  }
  func.func @transform_4(%arg0: i32) -> (i32, i32) {
    %c0_i32 = arith.constant 0 : i32
    %c0_i32_0 = arith.constant 0 : i32
    %c0_i32_1 = arith.constant 0 : i32
    return %c0_i32, %c0_i32_0 : i32, i32
  }
  func.func @transform_5(%arg0: i32) -> (i32, i32) {
    %c0_i32 = arith.constant 0 : i32
    %c0_i32_0 = arith.constant 0 : i32
    %c0_i32_1 = arith.constant 0 : i32
    return %c0_i32, %c0_i32_0 : i32, i32
  }
  func.func @transform_6(%arg0: i32) -> (i32, i32) {
    %c0_i32 = arith.constant 0 : i32
    %c0_i32_0 = arith.constant 0 : i32
    %c0_i32_1 = arith.constant 0 : i32
    return %c0_i32, %c0_i32_0 : i32, i32
  }
  func.func @transform_7(%arg0: i32) -> (i32, i32, i32) {
    %c0_i32 = arith.constant 0 : i32
    %c0_i32_0 = arith.constant 0 : i32
    %c0_i32_1 = arith.constant 0 : i32
    return %arg0, %c0_i32, %c0_i32_0 : i32, i32, i32
  }
}

</mosaic_0001>

<llo_original>
// kernel: tpu_custom_call.1
$region0: #{tpu_custom_call.1}
  #allocation0 [shape = 'u32[]', space=smem, size = 0x4, offset = 0x4, fixed_abs, tag = 'smem constant byte address 0x4 - core index']
  #allocation1 [shape = 'u32[72,128]{1,0:T(1,128)}', space=vmem, size = 0x9000, scoped, tag = 'internal scratch']
  #allocation2 [shape = 'f32[1,1]{1,0:T(1,128)S(6)}', space=smem, size = 0x200, scoped, tag = 'scoped memory for tpu_custom_call.1']
  %s0 = inlined_call_operand.vmem [shape: f32[1,1,2048], index: 0, kind: input, shape index: {}]
  %s1 = inlined_call_operand.vmem [shape: f32[32,1], index: 1, kind: input, shape index: {}]
  %s2 = inlined_call_operand.vmem [shape: f32[32,1], index: 2, kind: input, shape index: {}]
  %s3 = inlined_call_operand.vmem [shape: f32[20,32], index: 3, kind: input, shape index: {}]
  %s4 = inlined_call_operand.vmem [shape: f32[20,1], index: 4, kind: input, shape index: {}]
  %s5 = inlined_call_operand.vmem [shape: f32[1,20], index: 5, kind: input, shape index: {}]
  %s6 = inlined_call_operand.<no memory space> [shape: f32[1,1], index: 6, kind: input, shape index: {}]
  %s7 = inlined_call_operand.hbm [shape: f32[1,1,128], index: 7, kind: output, shape index: {}]
  %s8 = sld [smem:[#allocation0]]
  $region38: #{tpu_custom_call.1} parent=0
    _
  %s10 = ssub.s32 1, %s8
  %s11 = scalar_select 0, %s10, %s8
  %12 = sst [smem:[#allocation2]] %s6
  $region1: #{tpu_custom_call.1} parent=0
    #allocation3 [shape = 'u8[512]{0}', space=vmem, size = 0x400, scoped, tag = 'output window, operand 0, single buffered']
    #allocation4 [shape = 's32[1]{0}', space=sflag, size = 0x4, scoped, tag = 'scoped memory for tpu_custom_call.1']
    %13 = vsyncpa [#allocation4], 0
    // Predicated region
    $region2: #{tpu_custom_call.1} parent=1 // pred_check
      _
    $region3: #{tpu_custom_call.1} parent=1 // pred_check_branch
      %15 = sbr.rel (0) target = $region5
    $region4: #{tpu_custom_call.1} parent=1 // pred_region
      _
    $region5: #{tpu_custom_call.1} parent=1 // pred_fallthru
      _
    // Predicated region
    $region6: #{tpu_custom_call.1} parent=1 // pred_check
      _
    $region7: #{tpu_custom_call.1} parent=1 // pred_check_branch
      %17 = sbr.rel (0) target = $region9
    $region8: #{tpu_custom_call.1} parent=1 // pred_region
      _
    $region9: #{tpu_custom_call.1} parent=1 // pred_fallthru
      _
    // Predicated region
    $region10: #{tpu_custom_call.1} parent=1 // pred_check
      _
    $region11: #{tpu_custom_call.1} parent=1 // pred_check_branch
      %19 = sbr.rel (0) target = $region13
    $region12: #{tpu_custom_call.1} parent=1 // pred_region
      _
    $region13: #{tpu_custom_call.1} parent=1 // pred_fallthru
      _
    // Predicated region
    $region14: #{tpu_custom_call.1} parent=1 // pred_check
      _
    $region15: #{tpu_custom_call.1} parent=1 // pred_check_branch
      %21 = sbr.rel (0) target = $region17
    $region16: #{tpu_custom_call.1} parent=1 // pred_region
      _
    $region17: #{tpu_custom_call.1} parent=1 // pred_fallthru
      _
    // Predicated region
    $region18: #{tpu_custom_call.1} parent=1 // pred_check
      _
    $region19: #{tpu_custom_call.1} parent=1 // pred_check_branch
      %23 = sbr.rel (0) target = $region21
    $region20: #{tpu_custom_call.1} parent=1 // pred_region
      _
    $region21: #{tpu_custom_call.1} parent=1 // pred_fallthru
      _
    // Predicated region
    $region22: #{tpu_custom_call.1} parent=1 // pred_check
      _
    $region23: #{tpu_custom_call.1} parent=1 // pred_check_branch
      %25 = sbr.rel (0) target = $region25
    $region24: #{tpu_custom_call.1} parent=1 // pred_region
      _
    $region25: #{tpu_custom_call.1} parent=1 // pred_fallthru
      _
    // Predicated region
    $region26: #{tpu_custom_call.1} parent=1 // pred_check
      _
    $region27: #{tpu_custom_call.1} parent=1 // pred_check_branch
      %27 = sbr.rel (0) target = $region29
    $region28: #{tpu_custom_call.1} parent=1 // pred_region
      _
    $region29: #{tpu_custom_call.1} parent=1 // pred_fallthru
      _
    %v28 = vld [vmem:[%s0] sm:$0xff]
    %v29 = vld [vmem:[%s0 + $0x8] sm:$0xff]
    %v30 = vld [vmem:[%s1] sm:$0xff]
    %v31 = vld [vmem:[%s1 + $0x8] sm:$0xff]
    %v32 = vld [vmem:[%s1 + $0x10] sm:$0xff]
    %v33 = vld [vmem:[%s1 + $0x18] sm:$0xff]
    %35 = vset.pattern.permute.xlu0 0
    %36 = vperm.xlu0 %35, %v30
    %v37 = vpop.permute.xlu0 %36
    %40 = vset.pattern.permute.xlu0 0
    %41 = vperm.xlu0 %40, %v31
    %v42 = vpop.permute.xlu0 %41
    %45 = vset.pattern.permute.xlu0 0
    %46 = vperm.xlu0 %45, %v32
    %v47 = vpop.permute.xlu0 %46
    %50 = vset.pattern.permute.xlu0 0
    %51 = vperm.xlu0 %50, %v33
    %v52 = vpop.permute.xlu0 %51
    %v56 = vperm.slane %v28, 0
    %v57 = vperm.slane %v28, 1
    %v58 = vperm.slane %v28, 2
    %v59 = vperm.slane %v28, 3
    %v60 = vperm.slane %v28, 4
    %v61 = vperm.slane %v28, 5
    %v62 = vperm.slane %v28, 6
    %v63 = vperm.slane %v28, 7
    %v64 = vperm.slane %v29, 0
    %v65 = vperm.slane %v29, 1
    %v66 = vperm.slane %v29, 2
    %v67 = vperm.slane %v29, 3
    %v68 = vperm.slane %v29, 4
    %v69 = vperm.slane %v29, 5
    %v70 = vperm.slane %v29, 6
    %v71 = vperm.slane %v29, 7
    %v88 = vmul.f32 %v37, %v56
    %v89 = vmul.f32 %v37, %v57
    %v90 = vmul.f32 %v37, %v58
    %v91 = vmul.f32 %v37, %v59
    %v92 = vmul.f32 %v37, %v60
    %v93 = vmul.f32 %v37, %v61
    %v94 = vmul.f32 %v37, %v62
    %v95 = vmul.f32 %v37, %v63
    %v96 = vmul.f32 %v37, %v64
    %v97 = vmul.f32 %v37, %v65
    %v98 = vmul.f32 %v37, %v66
    %v99 = vmul.f32 %v37, %v67
    %v100 = vmul.f32 %v37, %v68
    %v101 = vmul.f32 %v37, %v69
    %v102 = vmul.f32 %v37, %v70
    %v103 = vmul.f32 %v37, %v71
    %v104 = vmul.f32 %v42, %v56
    %v105 = vmul.f32 %v42, %v57
    %v106 = vmul.f32 %v42, %v58
    %v107 = vmul.f32 %v42, %v59
    %v108 = vmul.f32 %v42, %v60
    %v109 = vmul.f32 %v42, %v61
    %v110 = vmul.f32 %v42, %v62
    %v111 = vmul.f32 %v42, %v63
    %v112 = vmul.f32 %v42, %v64
    %v113 = vmul.f32 %v42, %v65
    %v114 = vmul.f32 %v42, %v66
    %v115 = vmul.f32 %v42, %v67
    %v116 = vmul.f32 %v42, %v68
    %v117 = vmul.f32 %v42, %v69
    %v118 = vmul.f32 %v42, %v70
    %v119 = vmul.f32 %v42, %v71
    %v120 = vmul.f32 %v47, %v56
    %v121 = vmul.f32 %v47, %v57
    %v122 = vmul.f32 %v47, %v58
    %v123 = vmul.f32 %v47, %v59
    %v124 = vmul.f32 %v47, %v60
    %v125 = vmul.f32 %v47, %v61
    %v126 = vmul.f32 %v47, %v62
    %v127 = vmul.f32 %v47, %v63
    %v128 = vmul.f32 %v47, %v64
    %v129 = vmul.f32 %v47, %v65
    %v130 = vmul.f32 %v47, %v66
    %v131 = vmul.f32 %v47, %v67
    %v132 = vmul.f32 %v47, %v68
    %v133 = vmul.f32 %v47, %v69
    %v134 = vmul.f32 %v47, %v70
    %v135 = vmul.f32 %v47, %v71
    %v136 = vmul.f32 %v52, %v56
    %v137 = vmul.f32 %v52, %v57
    %v138 = vmul.f32 %v52, %v58
    %v139 = vmul.f32 %v52, %v59
    %v140 = vmul.f32 %v52, %v60
    %v141 = vmul.f32 %v52, %v61
    %v142 = vmul.f32 %v52, %v62
    %v143 = vmul.f32 %v52, %v63
    %v144 = vmul.f32 %v52, %v64
    %v145 = vmul.f32 %v52, %v65
    %v146 = vmul.f32 %v52, %v66
    %v147 = vmul.f32 %v52, %v67
    %v148 = vmul.f32 %v52, %v68
    %v149 = vmul.f32 %v52, %v69
    %v150 = vmul.f32 %v52, %v70
    %v151 = vmul.f32 %v52, %v71
    %v152 = vld [vmem:[%s2] sm:$0xff]
    %v153 = vld [vmem:[%s2 + $0x8] sm:$0xff]
    %v154 = vld [vmem:[%s2 + $0x10] sm:$0xff]
    %v155 = vld [vmem:[%s2 + $0x18] sm:$0xff]
    %157 = vset.pattern.permute.xlu0 0
    %158 = vperm.xlu0 %157, %v152
    %v159 = vpop.permute.xlu0 %158
    %162 = vset.pattern.permute.xlu0 0
    %163 = vperm.xlu0 %162, %v153
    %v164 = vpop.permute.xlu0 %163
    %167 = vset.pattern.permute.xlu0 0
    %168 = vperm.xlu0 %167, %v154
    %v169 = vpop.permute.xlu0 %168
    %172 = vset.pattern.permute.xlu0 0
    %173 = vperm.xlu0 %172, %v155
    %v174 = vpop.permute.xlu0 %173
    %v176 = vadd.f32 %v88, %v159
    %v177 = vadd.f32 %v89, %v159
    %v178 = vadd.f32 %v90, %v159
    %v179 = vadd.f32 %v91, %v159
    %v180 = vadd.f32 %v92, %v159
    %v181 = vadd.f32 %v93, %v159
    %v182 = vadd.f32 %v94, %v159
    %v183 = vadd.f32 %v95, %v159
    %v184 = vadd.f32 %v96, %v159
    %v185 = vadd.f32 %v97, %v159
    %v186 = vadd.f32 %v98, %v159
    %v187 = vadd.f32 %v99, %v159
    %v188 = vadd.f32 %v100, %v159
    %v189 = vadd.f32 %v101, %v159
    %v190 = vadd.f32 %v102, %v159
    %v191 = vadd.f32 %v103, %v159
    %v192 = vadd.f32 %v104, %v164
    %v193 = vadd.f32 %v105, %v164
    %v194 = vadd.f32 %v106, %v164
    %v195 = vadd.f32 %v107, %v164
    %v196 = vadd.f32 %v108, %v164
    %v197 = vadd.f32 %v109, %v164
    %v198 = vadd.f32 %v110, %v164
    %v199 = vadd.f32 %v111, %v164
    %v200 = vadd.f32 %v112, %v164
    %v201 = vadd.f32 %v113, %v164
    %v202 = vadd.f32 %v114, %v164
    %v203 = vadd.f32 %v115, %v164
    %v204 = vadd.f32 %v116, %v164
    %v205 = vadd.f32 %v117, %v164
    %v206 = vadd.f32 %v118, %v164
    %v207 = vadd.f32 %v119, %v164
    %v208 = vadd.f32 %v120, %v169
    %v209 = vadd.f32 %v121, %v169
    %v210 = vadd.f32 %v122, %v169
    %v211 = vadd.f32 %v123, %v169
    %v212 = vadd.f32 %v124, %v169
    %v213 = vadd.f32 %v125, %v169
    %v214 = vadd.f32 %v126, %v169
    %v215 = vadd.f32 %v127, %v169
    %v216 = vadd.f32 %v128, %v169
    %v217 = vadd.f32 %v129, %v169
    %v218 = vadd.f32 %v130, %v169
    %v219 = vadd.f32 %v131, %v169
    %v220 = vadd.f32 %v132, %v169
    %v221 = vadd.f32 %v133, %v169
    %v222 = vadd.f32 %v134, %v169
    %v223 = vadd.f32 %v135, %v169
    %v224 = vadd.f32 %v136, %v174
    %v225 = vadd.f32 %v137, %v174
    %v226 = vadd.f32 %v138, %v174
    %v227 = vadd.f32 %v139, %v174
    %v228 = vadd.f32 %v140, %v174
    %v229 = vadd.f32 %v141, %v174
    %v230 = vadd.f32 %v142, %v174
    %v231 = vadd.f32 %v143, %v174
    %v232 = vadd.f32 %v144, %v174
    %v233 = vadd.f32 %v145, %v174
    %v234 = vadd.f32 %v146, %v174
    %v235 = vadd.f32 %v147, %v174
    %v236 = vadd.f32 %v148, %v174
    %v237 = vadd.f32 %v149, %v174
    %v238 = vadd.f32 %v150, %v174
    %v239 = vadd.f32 %v151, %v174
    %v240 = vmax.f32 %v176, 0.0
    %v241 = vmax.f32 %v177, 0.0
    %v242 = vmax.f32 %v178, 0.0
    %v243 = vmax.f32 %v179, 0.0
    %v244 = vmax.f32 %v180, 0.0
    %v245 = vmax.f32 %v181, 0.0
    %v246 = vmax.f32 %v182, 0.0
    %v247 = vmax.f32 %v183, 0.0
    %v248 = vmax.f32 %v184, 0.0
    %v249 = vmax.f32 %v185, 0.0
    %v250 = vmax.f32 %v186, 0.0
    %v251 = vmax.f32 %v187, 0.0
    %v252 = vmax.f32 %v188, 0.0
    %v253 = vmax.f32 %v189, 0.0
    %v254 = vmax.f32 %v190, 0.0
    %v255 = vmax.f32 %v191, 0.0
    %v256 = vmax.f32 %v192, 0.0
    %v257 = vmax.f32 %v193, 0.0
    %v258 = vmax.f32 %v194, 0.0
    %v259 = vmax.f32 %v195, 0.0
    %v260 = vmax.f32 %v196, 0.0
    %v261 = vmax.f32 %v197, 0.0
    %v262 = vmax.f32 %v198, 0.0
    %v263 = vmax.f32 %v199, 0.0
    %v264 = vmax.f32 %v200, 0.0
    %v265 = vmax.f32 %v201, 0.0
    %v266 = vmax.f32 %v202, 0.0
    %v267 = vmax.f32 %v203, 0.0
    %v268 = vmax.f32 %v204, 0.0
    %v269 = vmax.f32 %v205, 0.0
    %v270 = vmax.f32 %v206, 0.0
    %v271 = vmax.f32 %v207, 0.0
    %v272 = vmax.f32 %v208, 0.0
    %v273 = vmax.f32 %v209, 0.0
    %v274 = vmax.f32 %v210, 0.0
    %v275 = vmax.f32 %v211, 0.0
    %v276 = vmax.f32 %v212, 0.0
    %v277 = vmax.f32 %v213, 0.0
    %v278 = vmax.f32 %v214, 0.0
    %v279 = vmax.f32 %v215, 0.0
    %v280 = vmax.f32 %v216, 0.0
    %v281 = vmax.f32 %v217, 0.0
    %v282 = vmax.f32 %v218, 0.0
    %v283 = vmax.f32 %v219, 0.0
    %v284 = vmax.f32 %v220, 0.0
    %v285 = vmax.f32 %v221, 0.0
    %v286 = vmax.f32 %v222, 0.0
    %v287 = vmax.f32 %v223, 0.0
    %v288 = vmax.f32 %v224, 0.0
    %v289 = vmax.f32 %v225, 0.0
    %v290 = vmax.f32 %v226, 0.0
    %v291 = vmax.f32 %v227, 0.0
    %v292 = vmax.f32 %v228, 0.0
    %v293 = vmax.f32 %v229, 0.0
    %v294 = vmax.f32 %v230, 0.0
    %v295 = vmax.f32 %v231, 0.0
    %v296 = vmax.f32 %v232, 0.0
    %v297 = vmax.f32 %v233, 0.0
    %v298 = vmax.f32 %v234, 0.0
    %v299 = vmax.f32 %v235, 0.0
    %v300 = vmax.f32 %v236, 0.0
    %v301 = vmax.f32 %v237, 0.0
    %v302 = vmax.f32 %v238, 0.0
    %v303 = vmax.f32 %v239, 0.0
    %v304 = vld [vmem:[%s3] sm:$0xff]
    %v305 = vld [vmem:[%s3 + $0x8] sm:$0xff]
    %v306 = vld [vmem:[%s3 + $0x10] sm:$0xf]
    %v307 = vld [vmem:[%s4] sm:$0xff]
    %v308 = vld [vmem:[%s4 + $0x8] sm:$0xff]
    %v309 = vld [vmem:[%s4 + $0x10] sm:$0xf]
    %311 = vset.pattern.permute.xlu0 0
    %312 = vperm.xlu0 %311, %v307
    %v313 = vpop.permute.xlu0 %312
    %316 = vset.pattern.permute.xlu0 0
    %317 = vperm.xlu0 %316, %v308
    %v318 = vpop.permute.xlu0 %317
    %321 = vset.pattern.permute.xlu0 0
    %322 = vperm.xlu0 %321, %v309
    %v323 = vpop.permute.xlu0 %322
    %vm325 = vcmask 261120
    %v327 = vsel %vm325, %v304, 0
    %v330 = vsel %vm325, %v305, 0
    %v333 = vsel %vm325, %v306, 0
    %335 = vmatpush.msra.mxu0 0.0
    %336 = vmatpush.msra.mxu0 0.0
    %337 = vmatpush.msra.mxu0 0.0
    %338 = vmatpush.msra.mxu0 0.0
    %339 = vmatpush.msra.mxu0 0.0
    %340 = vmatpush.msra.mxu0 0.0
    %341 = vmatpush.msra.mxu0 0.0
    %342 = vmatpush.msra.mxu0 0.0
    %343 = vmatpush.msra.mxu0 0.0
    %344 = vmatpush.msra.mxu0 0.0
    %345 = vmatpush.msra.mxu0 0.0
    %346 = vmatpush.msra.mxu0 0.0
    %347 = vmatpush.msra.mxu0 %v288
    %348 = vmatpush.msra.mxu0 %v272
    %349 = vmatpush.msra.mxu0 %v256
    %350 = vmatpush.msra.mxu0 %v240
    %351 = vmatmul.f32.gmra.mxu0 %v327
    %v352 = vpop.f32.mrf.mxu0
    %v353 = vadd.f32 %v313, %v352
    %354 = vmatmul.f32.gmra.mxu0 %v330
    %v355 = vpop.f32.mrf.mxu0
    %v356 = vadd.f32 %v318, %v355
    %357 = vmatmul.f32.gmra.mxu0 %v333
    %v358 = vpop.f32.mrf.mxu0
    %v359 = vadd.f32 %v323, %v358
    %360 = vdwg.mxu0
    %361 = vmatpush.msra.mxu0 0.0
    %362 = vmatpush.msra.mxu0 0.0
    %363 = vmatpush.msra.mxu0 0.0
    %364 = vmatpush.msra.mxu0 0.0
    %365 = vmatpush.msra.mxu0 0.0
    %366 = vmatpush.msra.mxu0 0.0
    %367 = vmatpush.msra.mxu0 0.0
    %368 = vmatpush.msra.mxu0 0.0
    %369 = vmatpush.msra.mxu0 0.0
    %370 = vmatpush.msra.mxu0 0.0
    %371 = vmatpush.msra.mxu0 0.0
    %372 = vmatpush.msra.mxu0 0.0
    %373 = vmatpush.msra.mxu0 %v289
    %374 = vmatpush.msra.mxu0 %v273
    %375 = vmatpush.msra.mxu0 %v257
    %376 = vmatpush.msra.mxu0 %v241
    %377 = vmatmul.f32.gmra.mxu0 %v327
    %v378 = vpop.f32.mrf.mxu0
    %v379 = vadd.f32 %v313, %v378
    %380 = vmatmul.f32.gmra.mxu0 %v330
    %v381 = vpop.f32.mrf.mxu0
    %v382 = vadd.f32 %v318, %v381
    %383 = vmatmul.f32.gmra.mxu0 %v333
    %v384 = vpop.f32.mrf.mxu0
    %v385 = vadd.f32 %v323, %v384
    %386 = vdwg.mxu0
    %387 = vmatpush.msra.mxu0 0.0
    %388 = vmatpush.msra.mxu0 0.0
    %389 = vmatpush.msra.mxu0 0.0
    %390 = vmatpush.msra.mxu0 0.0
    %391 = vmatpush.msra.mxu0 0.0
    %392 = vmatpush.msra.mxu0 0.0
    %393 = vmatpush.msra.mxu0 0.0
    %394 = vmatpush.msra.mxu0 0.0
    %395 = vmatpush.msra.mxu0 0.0
    %396 = vmatpush.msra.mxu0 0.0
    %397 = vmatpush.msra.mxu0 0.0
    %398 = vmatpush.msra.mxu0 0.0
    %399 = vmatpush.msra.mxu0 %v290
    %400 = vmatpush.msra.mxu0 %v274
    %401 = vmatpush.msra.mxu0 %v258
    %402 = vmatpush.msra.mxu0 %v242
    %403 = vmatmul.f32.gmra.mxu0 %v327
    %v404 = vpop.f32.mrf.mxu0
    %v405 = vadd.f32 %v313, %v404
    %406 = vmatmul.f32.gmra.mxu0 %v330
    %v407 = vpop.f32.mrf.mxu0
    %v408 = vadd.f32 %v318, %v407
    %409 = vmatmul.f32.gmra.mxu0 %v333
    %v410 = vpop.f32.mrf.mxu0
    %v411 = vadd.f32 %v323, %v410
    %412 = vdwg.mxu0
    %413 = vmatpush.msra.mxu0 0.0
    %414 = vmatpush.msra.mxu0 0.0
    %415 = vmatpush.msra.mxu0 0.0
    %416 = vmatpush.msra.mxu0 0.0
    %417 = vmatpush.msra.mxu0 0.0
    %418 = vmatpush.msra.mxu0 0.0
    %419 = vmatpush.msra.mxu0 0.0
    %420 = vmatpush.msra.mxu0 0.0
    %421 = vmatpush.msra.mxu0 0.0
    %422 = vmatpush.msra.mxu0 0.0
    %423 = vmatpush.msra.mxu0 0.0
    %424 = vmatpush.msra.mxu0 0.0
    %425 = vmatpush.msra.mxu0 %v291
    %426 = vmatpush.msra.mxu0 %v275
    %427 = vmatpush.msra.mxu0 %v259
    %428 = vmatpush.msra.mxu0 %v243
    %429 = vmatmul.f32.gmra.mxu0 %v327
    %v430 = vpop.f32.mrf.mxu0
    %v431 = vadd.f32 %v313, %v430
    %432 = vmatmul.f32.gmra.mxu0 %v330
    %v433 = vpop.f32.mrf.mxu0
    %v434 = vadd.f32 %v318, %v433
    %435 = vmatmul.f32.gmra.mxu0 %v333
    %v436 = vpop.f32.mrf.mxu0
    %v437 = vadd.f32 %v323, %v436
    %438 = vdwg.mxu0
    %439 = vmatpush.msra.mxu0 0.0
    %440 = vmatpush.msra.mxu0 0.0
    %441 = vmatpush.msra.mxu0 0.0
    %442 = vmatpush.msra.mxu0 0.0
    %443 = vmatpush.msra.mxu0 0.0
    %444 = vmatpush.msra.mxu0 0.0
    %445 = vmatpush.msra.mxu0 0.0
    %446 = vmatpush.msra.mxu0 0.0
    %447 = vmatpush.msra.mxu0 0.0
    %448 = vmatpush.msra.mxu0 0.0
    %449 = vmatpush.msra.mxu0 0.0
    %450 = vmatpush.msra.mxu0 0.0
    %451 = vmatpush.msra.mxu0 %v292
    %452 = vmatpush.msra.mxu0 %v276
    %453 = vmatpush.msra.mxu0 %v260
    %454 = vmatpush.msra.mxu0 %v244
    %455 = vmatmul.f32.gmra.mxu0 %v327
    %v456 = vpop.f32.mrf.mxu0
    %v457 = vadd.f32 %v313, %v456
    %458 = vmatmul.f32.gmra.mxu0 %v330
    %v459 = vpop.f32.mrf.mxu0
    %v460 = vadd.f32 %v318, %v459
    %461 = vmatmul.f32.gmra.mxu0 %v333
    %v462 = vpop.f32.mrf.mxu0
    %v463 = vadd.f32 %v323, %v462
    %464 = vdwg.mxu0
    %465 = vmatpush.msra.mxu0 0.0
    %466 = vmatpush.msra.mxu0 0.0
    %467 = vmatpush.msra.mxu0 0.0
    %468 = vmatpush.msra.mxu0 0.0
    %469 = vmatpush.msra.mxu0 0.0
    %470 = vmatpush.msra.mxu0 0.0
    %471 = vmatpush.msra.mxu0 0.0
    %472 = vmatpush.msra.mxu0 0.0
    %473 = vmatpush.msra.mxu0 0.0
    %474 = vmatpush.msra.mxu0 0.0
    %475 = vmatpush.msra.mxu0 0.0
    %476 = vmatpush.msra.mxu0 0.0
    %477 = vmatpush.msra.mxu0 %v293
    %478 = vmatpush.msra.mxu0 %v277
    %479 = vmatpush.msra.mxu0 %v261
    %480 = vmatpush.msra.mxu0 %v245
    %481 = vmatmul.f32.gmra.mxu0 %v327
    %v482 = vpop.f32.mrf.mxu0
    %v483 = vadd.f32 %v313, %v482
    %484 = vmatmul.f32.gmra.mxu0 %v330
    %v485 = vpop.f32.mrf.mxu0
    %v486 = vadd.f32 %v318, %v485
    %487 = vmatmul.f32.gmra.mxu0 %v333
    %v488 = vpop.f32.mrf.mxu0
    %v489 = vadd.f32 %v323, %v488
    %490 = vdwg.mxu0
    %491 = vmatpush.msra.mxu0 0.0
    %492 = vmatpush.msra.mxu0 0.0
    %493 = vmatpush.msra.mxu0 0.0
    %494 = vmatpush.msra.mxu0 0.0
    %495 = vmatpush.msra.mxu0 0.0
    %496 = vmatpush.msra.mxu0 0.0
    %497 = vmatpush.msra.mxu0 0.0
    %498 = vmatpush.msra.mxu0 0.0
    %499 = vmatpush.msra.mxu0 0.0
    %500 = vmatpush.msra.mxu0 0.0
    %501 = vmatpush.msra.mxu0 0.0
    %502 = vmatpush.msra.mxu0 0.0
    %503 = vmatpush.msra.mxu0 %v294
    %504 = vmatpush.msra.mxu0 %v278
    %505 = vmatpush.msra.mxu0 %v262
    %506 = vmatpush.msra.mxu0 %v246
    %507 = vmatmul.f32.gmra.mxu0 %v327
    %v508 = vpop.f32.mrf.mxu0
    %v509 = vadd.f32 %v313, %v508
    %510 = vmatmul.f32.gmra.mxu0 %v330
    %v511 = vpop.f32.mrf.mxu0
    %v512 = vadd.f32 %v318, %v511
    %513 = vmatmul.f32.gmra.mxu0 %v333
    %v514 = vpop.f32.mrf.mxu0
    %v515 = vadd.f32 %v323, %v514
    %516 = vdwg.mxu0
    %517 = vmatpush.msra.mxu0 0.0
    %518 = vmatpush.msra.mxu0 0.0
    %519 = vmatpush.msra.mxu0 0.0
    %520 = vmatpush.msra.mxu0 0.0
    %521 = vmatpush.msra.mxu0 0.0
    %522 = vmatpush.msra.mxu0 0.0
    %523 = vmatpush.msra.mxu0 0.0
    %524 = vmatpush.msra.mxu0 0.0
    %525 = vmatpush.msra.mxu0 0.0
    %526 = vmatpush.msra.mxu0 0.0
    %527 = vmatpush.msra.mxu0 0.0
    %528 = vmatpush.msra.mxu0 0.0
    %529 = vmatpush.msra.mxu0 %v295
    %530 = vmatpush.msra.mxu0 %v279
    %531 = vmatpush.msra.mxu0 %v263
    %532 = vmatpush.msra.mxu0 %v247
    %533 = vmatmul.f32.gmra.mxu0 %v327
    %v534 = vpop.f32.mrf.mxu0
    %v535 = vadd.f32 %v313, %v534
    %536 = vmatmul.f32.gmra.mxu0 %v330
    %v537 = vpop.f32.mrf.mxu0
    %v538 = vadd.f32 %v318, %v537
    %539 = vmatmul.f32.gmra.mxu0 %v333
    %v540 = vpop.f32.mrf.mxu0
    %v541 = vadd.f32 %v323, %v540
    %542 = vdwg.mxu0
    %543 = vmatpush.msra.mxu0 0.0
    %544 = vmatpush.msra.mxu0 0.0
    %545 = vmatpush.msra.mxu0 0.0
    %546 = vmatpush.msra.mxu0 0.0
    %547 = vmatpush.msra.mxu0 0.0
    %548 = vmatpush.msra.mxu0 0.0
    %549 = vmatpush.msra.mxu0 0.0
    %550 = vmatpush.msra.mxu0 0.0
    %551 = vmatpush.msra.mxu0 0.0
    %552 = vmatpush.msra.mxu0 0.0
    %553 = vmatpush.msra.mxu0 0.0
    %554 = vmatpush.msra.mxu0 0.0
    %555 = vmatpush.msra.mxu0 %v296
    %556 = vmatpush.msra.mxu0 %v280
    %557 = vmatpush.msra.mxu0 %v264
    %558 = vmatpush.msra.mxu0 %v248
    %559 = vmatmul.f32.gmra.mxu0 %v327
    %v560 = vpop.f32.mrf.mxu0
    %v561 = vadd.f32 %v313, %v560
    %562 = vmatmul.f32.gmra.mxu0 %v330
    %v563 = vpop.f32.mrf.mxu0
    %v564 = vadd.f32 %v318, %v563
    %565 = vmatmul.f32.gmra.mxu0 %v333
    %v566 = vpop.f32.mrf.mxu0
    %v567 = vadd.f32 %v323, %v566
    %568 = vdwg.mxu0
    %569 = vmatpush.msra.mxu0 0.0
    %570 = vmatpush.msra.mxu0 0.0
    %571 = vmatpush.msra.mxu0 0.0
    %572 = vmatpush.msra.mxu0 0.0
    %573 = vmatpush.msra.mxu0 0.0
    %574 = vmatpush.msra.mxu0 0.0
    %575 = vmatpush.msra.mxu0 0.0
    %576 = vmatpush.msra.mxu0 0.0
    %577 = vmatpush.msra.mxu0 0.0
    %578 = vmatpush.msra.mxu0 0.0
    %579 = vmatpush.msra.mxu0 0.0
    %580 = vmatpush.msra.mxu0 0.0
    %581 = vmatpush.msra.mxu0 %v297
    %582 = vmatpush.msra.mxu0 %v281
    %583 = vmatpush.msra.mxu0 %v265
    %584 = vmatpush.msra.mxu0 %v249
    %585 = vmatmul.f32.gmra.mxu0 %v327
    %v586 = vpop.f32.mrf.mxu0
    %v587 = vadd.f32 %v313, %v586
    %588 = vmatmul.f32.gmra.mxu0 %v330
    %v589 = vpop.f32.mrf.mxu0
    %v590 = vadd.f32 %v318, %v589
    %591 = vmatmul.f32.gmra.mxu0 %v333
    %v592 = vpop.f32.mrf.mxu0
    %v593 = vadd.f32 %v323, %v592
    %594 = vdwg.mxu0
    %595 = vmatpush.msra.mxu0 0.0
    %596 = vmatpush.msra.mxu0 0.0
    %597 = vmatpush.msra.mxu0 0.0
    %598 = vmatpush.msra.mxu0 0.0
    %599 = vmatpush.msra.mxu0 0.0
    %600 = vmatpush.msra.mxu0 0.0
    %601 = vmatpush.msra.mxu0 0.0
    %602 = vmatpush.msra.mxu0 0.0
    %603 = vmatpush.msra.mxu0 0.0
    %604 = vmatpush.msra.mxu0 0.0
    %605 = vmatpush.msra.mxu0 0.0
    %606 = vmatpush.msra.mxu0 0.0
    %607 = vmatpush.msra.mxu0 %v298
    %608 = vmatpush.msra.mxu0 %v282
    %609 = vmatpush.msra.mxu0 %v266
    %610 = vmatpush.msra.mxu0 %v250
    %611 = vmatmul.f32.gmra.mxu0 %v327
    %v612 = vpop.f32.mrf.mxu0
    %v613 = vadd.f32 %v313, %v612
    %614 = vmatmul.f32.gmra.mxu0 %v330
    %v615 = vpop.f32.mrf.mxu0
    %v616 = vadd.f32 %v318, %v615
    %617 = vmatmul.f32.gmra.mxu0 %v333
    %v618 = vpop.f32.mrf.mxu0
    %v619 = vadd.f32 %v323, %v618
    %620 = vdwg.mxu0
    %621 = vmatpush.msra.mxu0 0.0
    %622 = vmatpush.msra.mxu0 0.0
    %623 = vmatpush.msra.mxu0 0.0
    %624 = vmatpush.msra.mxu0 0.0
    %625 = vmatpush.msra.mxu0 0.0
    %626 = vmatpush.msra.mxu0 0.0
    %627 = vmatpush.msra.mxu0 0.0
    %628 = vmatpush.msra.mxu0 0.0
    %629 = vmatpush.msra.mxu0 0.0
    %630 = vmatpush.msra.mxu0 0.0
    %631 = vmatpush.msra.mxu0 0.0
    %632 = vmatpush.msra.mxu0 0.0
    %633 = vmatpush.msra.mxu0 %v299
    %634 = vmatpush.msra.mxu0 %v283
    %635 = vmatpush.msra.mxu0 %v267
    %636 = vmatpush.msra.mxu0 %v251
    %637 = vmatmul.f32.gmra.mxu0 %v327
    %v638 = vpop.f32.mrf.mxu0
    %v639 = vadd.f32 %v313, %v638
    %640 = vmatmul.f32.gmra.mxu0 %v330
    %v641 = vpop.f32.mrf.mxu0
    %v642 = vadd.f32 %v318, %v641
    %643 = vmatmul.f32.gmra.mxu0 %v333
    %v644 = vpop.f32.mrf.mxu0
    %v645 = vadd.f32 %v323, %v644
    %646 = vdwg.mxu0
    %647 = vmatpush.msra.mxu0 0.0
    %648 = vmatpush.msra.mxu0 0.0
    %649 = vmatpush.msra.mxu0 0.0
    %650 = vmatpush.msra.mxu0 0.0
    %651 = vmatpush.msra.mxu0 0.0
    %652 = vmatpush.msra.mxu0 0.0
    %653 = vmatpush.msra.mxu0 0.0
    %654 = vmatpush.msra.mxu0 0.0
    %655 = vmatpush.msra.mxu0 0.0
    %656 = vmatpush.msra.mxu0 0.0
    %657 = vmatpush.msra.mxu0 0.0
    %658 = vmatpush.msra.mxu0 0.0
    %659 = vmatpush.msra.mxu0 %v300
    %660 = vmatpush.msra.mxu0 %v284
    %661 = vmatpush.msra.mxu0 %v268
    %662 = vmatpush.msra.mxu0 %v252
    %663 = vmatmul.f32.gmra.mxu0 %v327
    %v664 = vpop.f32.mrf.mxu0
    %v665 = vadd.f32 %v313, %v664
    %666 = vmatmul.f32.gmra.mxu0 %v330
    %v667 = vpop.f32.mrf.mxu0
    %v668 = vadd.f32 %v318, %v667
    %669 = vmatmul.f32.gmra.mxu0 %v333
    %v670 = vpop.f32.mrf.mxu0
    %v671 = vadd.f32 %v323, %v670
    %672 = vdwg.mxu0
    %673 = vmatpush.msra.mxu0 0.0
    %674 = vmatpush.msra.mxu0 0.0
    %675 = vmatpush.msra.mxu0 0.0
    %676 = vmatpush.msra.mxu0 0.0
    %677 = vmatpush.msra.mxu0 0.0
    %678 = vmatpush.msra.mxu0 0.0
    %679 = vmatpush.msra.mxu0 0.0
    %680 = vmatpush.msra.mxu0 0.0
    %681 = vmatpush.msra.mxu0 0.0
    %682 = vmatpush.msra.mxu0 0.0
    %683 = vmatpush.msra.mxu0 0.0
    %684 = vmatpush.msra.mxu0 0.0
    %685 = vmatpush.msra.mxu0 %v301
    %686 = vmatpush.msra.mxu0 %v285
    %687 = vmatpush.msra.mxu0 %v269
    %688 = vmatpush.msra.mxu0 %v253
    %689 = vmatmul.f32.gmra.mxu0 %v327
    %v690 = vpop.f32.mrf.mxu0
    %v691 = vadd.f32 %v313, %v690
    %692 = vmatmul.f32.gmra.mxu0 %v330
    %v693 = vpop.f32.mrf.mxu0
    %v694 = vadd.f32 %v318, %v693
    %695 = vmatmul.f32.gmra.mxu0 %v333
    %v696 = vpop.f32.mrf.mxu0
    %v697 = vadd.f32 %v323, %v696
    %698 = vdwg.mxu0
    %699 = vmatpush.msra.mxu0 0.0
    %700 = vmatpush.msra.mxu0 0.0
    %701 = vmatpush.msra.mxu0 0.0
    %702 = vmatpush.msra.mxu0 0.0
    %703 = vmatpush.msra.mxu0 0.0
    %704 = vmatpush.msra.mxu0 0.0
    %705 = vmatpush.msra.mxu0 0.0
    %706 = vmatpush.msra.mxu0 0.0
    %707 = vmatpush.msra.mxu0 0.0
    %708 = vmatpush.msra.mxu0 0.0
    %709 = vmatpush.msra.mxu0 0.0
    %710 = vmatpush.msra.mxu0 0.0
    %711 = vmatpush.msra.mxu0 %v302
    %712 = vmatpush.msra.mxu0 %v286
    %713 = vmatpush.msra.mxu0 %v270
    %714 = vmatpush.msra.mxu0 %v254
    %715 = vmatmul.f32.gmra.mxu0 %v327
    %v716 = vpop.f32.mrf.mxu0
    %v717 = vadd.f32 %v313, %v716
    %718 = vmatmul.f32.gmra.mxu0 %v330
    %v719 = vpop.f32.mrf.mxu0
    %v720 = vadd.f32 %v318, %v719
    %721 = vmatmul.f32.gmra.mxu0 %v333
    %v722 = vpop.f32.mrf.mxu0
    %v723 = vadd.f32 %v323, %v722
    %724 = vdwg.mxu0
    %725 = vmatpush.msra.mxu0 0.0
    %726 = vmatpush.msra.mxu0 0.0
    %727 = vmatpush.msra.mxu0 0.0
    %728 = vmatpush.msra.mxu0 0.0
    %729 = vmatpush.msra.mxu0 0.0
    %730 = vmatpush.msra.mxu0 0.0
    %731 = vmatpush.msra.mxu0 0.0
    %732 = vmatpush.msra.mxu0 0.0
    %733 = vmatpush.msra.mxu0 0.0
    %734 = vmatpush.msra.mxu0 0.0
    %735 = vmatpush.msra.mxu0 0.0
    %736 = vmatpush.msra.mxu0 0.0
    %737 = vmatpush.msra.mxu0 %v303
    %738 = vmatpush.msra.mxu0 %v287
    %739 = vmatpush.msra.mxu0 %v271
    %740 = vmatpush.msra.mxu0 %v255
    %741 = vmatmul.f32.gmra.mxu0 %v327
    %v742 = vpop.f32.mrf.mxu0
    %v743 = vadd.f32 %v313, %v742
    %744 = vmatmul.f32.gmra.mxu0 %v330
    %v745 = vpop.f32.mrf.mxu0
    %v746 = vadd.f32 %v318, %v745
    %747 = vmatmul.f32.gmra.mxu0 %v333
    %v748 = vpop.f32.mrf.mxu0
    %v749 = vadd.f32 %v323, %v748
    %750 = vdwg.mxu0
    %v751 = vmax.f32 %v353, 0.0
    %v752 = vmax.f32 %v379, 0.0
    %v753 = vmax.f32 %v405, 0.0
    %v754 = vmax.f32 %v431, 0.0
    %v755 = vmax.f32 %v457, 0.0
    %v756 = vmax.f32 %v483, 0.0
    %v757 = vmax.f32 %v509, 0.0
    %v758 = vmax.f32 %v535, 0.0
    %v759 = vmax.f32 %v561, 0.0
    %v760 = vmax.f32 %v587, 0.0
    %v761 = vmax.f32 %v613, 0.0
    %v762 = vmax.f32 %v639, 0.0
    %v763 = vmax.f32 %v665, 0.0
    %v764 = vmax.f32 %v691, 0.0
    %v765 = vmax.f32 %v717, 0.0
    %v766 = vmax.f32 %v743, 0.0
    %v767 = vmax.f32 %v356, 0.0
    %v768 = vmax.f32 %v382, 0.0
    %v769 = vmax.f32 %v408, 0.0
    %v770 = vmax.f32 %v434, 0.0
    %v771 = vmax.f32 %v460, 0.0
    %v772 = vmax.f32 %v486, 0.0
    %v773 = vmax.f32 %v512, 0.0
    %v774 = vmax.f32 %v538, 0.0
    %v775 = vmax.f32 %v564, 0.0
    %v776 = vmax.f32 %v590, 0.0
    %v777 = vmax.f32 %v616, 0.0
    %v778 = vmax.f32 %v642, 0.0
    %v779 = vmax.f32 %v668, 0.0
    %v780 = vmax.f32 %v694, 0.0
    %v781 = vmax.f32 %v720, 0.0
    %v782 = vmax.f32 %v746, 0.0
    %v783 = vmax.f32 %v359, 0.0
    %v784 = vmax.f32 %v385, 0.0
    %v785 = vmax.f32 %v411, 0.0
    %v786 = vmax.f32 %v437, 0.0
    %v787 = vmax.f32 %v463, 0.0
    %v788 = vmax.f32 %v489, 0.0
    %v789 = vmax.f32 %v515, 0.0
    %v790 = vmax.f32 %v541, 0.0
    %v791 = vmax.f32 %v567, 0.0
    %v792 = vmax.f32 %v593, 0.0
    %v793 = vmax.f32 %v619, 0.0
    %v794 = vmax.f32 %v645, 0.0
    %v795 = vmax.f32 %v671, 0.0
    %v796 = vmax.f32 %v697, 0.0
    %v797 = vmax.f32 %v723, 0.0
    %v798 = vmax.f32 %v749, 0.0
    %v799 = vld [vmem:[%s5] sm:$0x1]
    %vm800 = vcmask 162816
    %v802 = vsel %vm800, %v799, 0
    %vm804 = vcmask 1043456
    %v806 = vsel %vm804, %v783, 0
    %v809 = vsel %vm804, %v784, 0
    %v812 = vsel %vm804, %v785, 0
    %v815 = vsel %vm804, %v786, 0
    %v818 = vsel %vm804, %v787, 0
    %v821 = vsel %vm804, %v788, 0
    %v824 = vsel %vm804, %v789, 0
    %v827 = vsel %vm804, %v790, 0
    %v830 = vsel %vm804, %v791, 0
    %v833 = vsel %vm804, %v792, 0
    %v836 = vsel %vm804, %v793, 0
    %v839 = vsel %vm804, %v794, 0
    %v842 = vsel %vm804, %v795, 0
    %v845 = vsel %vm804, %v796, 0
    %v848 = vsel %vm804, %v797, 0
    %v851 = vsel %vm804, %v798, 0
    %853 = vmatpush.msra.mxu0 0.0
    %854 = vmatpush.msra.mxu0 0.0
    %855 = vmatpush.msra.mxu0 0.0
    %856 = vmatpush.msra.mxu0 0.0
    %857 = vmatpush.msra.mxu0 0.0
    %858 = vmatpush.msra.mxu0 0.0
    %859 = vmatpush.msra.mxu0 0.0
    %860 = vmatpush.msra.mxu0 0.0
    %861 = vmatpush.msra.mxu0 0.0
    %862 = vmatpush.msra.mxu0 0.0
    %863 = vmatpush.msra.mxu0 0.0
    %864 = vmatpush.msra.mxu0 0.0
    %865 = vmatpush.msra.mxu0 0.0
    %866 = vmatpush.msra.mxu0 %v806
    %867 = vmatpush.msra.mxu0 %v767
    %868 = vmatpush.msra.mxu0 %v751
    %869 = vmatmul.f32.gmra.mxu0 %v802
    %v870 = vpop.f32.mrf.mxu0
    %v871 = vadd.f32 0.0, %v870
    %872 = vdwg.mxu0
    %873 = vmatpush.msra.mxu0 0.0
    %874 = vmatpush.msra.mxu0 0.0
    %875 = vmatpush.msra.mxu0 0.0
    %876 = vmatpush.msra.mxu0 0.0
    %877 = vmatpush.msra.mxu0 0.0
    %878 = vmatpush.msra.mxu0 0.0
    %879 = vmatpush.msra.mxu0 0.0
    %880 = vmatpush.msra.mxu0 0.0
    %881 = vmatpush.msra.mxu0 0.0
    %882 = vmatpush.msra.mxu0 0.0
    %883 = vmatpush.msra.mxu0 0.0
    %884 = vmatpush.msra.mxu0 0.0
    %885 = vmatpush.msra.mxu0 0.0
    %886 = vmatpush.msra.mxu0 %v809
    %887 = vmatpush.msra.mxu0 %v768
    %888 = vmatpush.msra.mxu0 %v752
    %889 = vmatmul.f32.gmra.mxu0 %v802
    %v890 = vpop.f32.mrf.mxu0
    %v891 = vadd.f32 0.0, %v890
    %892 = vdwg.mxu0
    %893 = vmatpush.msra.mxu0 0.0
    %894 = vmatpush.msra.mxu0 0.0
    %895 = vmatpush.msra.mxu0 0.0
    %896 = vmatpush.msra.mxu0 0.0
    %897 = vmatpush.msra.mxu0 0.0
    %898 = vmatpush.msra.mxu0 0.0
    %899 = vmatpush.msra.mxu0 0.0
    %900 = vmatpush.msra.mxu0 0.0
    %901 = vmatpush.msra.mxu0 0.0
    %902 = vmatpush.msra.mxu0 0.0
    %903 = vmatpush.msra.mxu0 0.0
    %904 = vmatpush.msra.mxu0 0.0
    %905 = vmatpush.msra.mxu0 0.0
    %906 = vmatpush.msra.mxu0 %v812
    %907 = vmatpush.msra.mxu0 %v769
    %908 = vmatpush.msra.mxu0 %v753
    %909 = vmatmul.f32.gmra.mxu0 %v802
    %v910 = vpop.f32.mrf.mxu0
    %v911 = vadd.f32 0.0, %v910
    %912 = vdwg.mxu0
    %913 = vmatpush.msra.mxu0 0.0
    %914 = vmatpush.msra.mxu0 0.0
    %915 = vmatpush.msra.mxu0 0.0
    %916 = vmatpush.msra.mxu0 0.0
    %917 = vmatpush.msra.mxu0 0.0
    %918 = vmatpush.msra.mxu0 0.0
    %919 = vmatpush.msra.mxu0 0.0
    %920 = vmatpush.msra.mxu0 0.0
    %921 = vmatpush.msra.mxu0 0.0
    %922 = vmatpush.msra.mxu0 0.0
    %923 = vmatpush.msra.mxu0 0.0
    %924 = vmatpush.msra.mxu0 0.0
    %925 = vmatpush.msra.mxu0 0.0
    %926 = vmatpush.msra.mxu0 %v815
    %927 = vmatpush.msra.mxu0 %v770
    %928 = vmatpush.msra.mxu0 %v754
    %929 = vmatmul.f32.gmra.mxu0 %v802
    %v930 = vpop.f32.mrf.mxu0
    %v931 = vadd.f32 0.0, %v930
    %932 = vdwg.mxu0
    %933 = vmatpush.msra.mxu0 0.0
    %934 = vmatpush.msra.mxu0 0.0
    %935 = vmatpush.msra.mxu0 0.0
    %936 = vmatpush.msra.mxu0 0.0
    %937 = vmatpush.msra.mxu0 0.0
    %938 = vmatpush.msra.mxu0 0.0
    %939 = vmatpush.msra.mxu0 0.0
    %940 = vmatpush.msra.mxu0 0.0
    %941 = vmatpush.msra.mxu0 0.0
    %942 = vmatpush.msra.mxu0 0.0
    %943 = vmatpush.msra.mxu0 0.0
    %944 = vmatpush.msra.mxu0 0.0
    %945 = vmatpush.msra.mxu0 0.0
    %946 = vmatpush.msra.mxu0 %v818
    %947 = vmatpush.msra.mxu0 %v771
    %948 = vmatpush.msra.mxu0 %v755
    %949 = vmatmul.f32.gmra.mxu0 %v802
    %v950 = vpop.f32.mrf.mxu0
    %v951 = vadd.f32 0.0, %v950
    %952 = vdwg.mxu0
    %953 = vmatpush.msra.mxu0 0.0
    %954 = vmatpush.msra.mxu0 0.0
    %955 = vmatpush.msra.mxu0 0.0
    %956 = vmatpush.msra.mxu0 0.0
    %957 = vmatpush.msra.mxu0 0.0
    %958 = vmatpush.msra.mxu0 0.0
    %959 = vmatpush.msra.mxu0 0.0
    %960 = vmatpush.msra.mxu0 0.0
    %961 = vmatpush.msra.mxu0 0.0
    %962 = vmatpush.msra.mxu0 0.0
    %963 = vmatpush.msra.mxu0 0.0
    %964 = vmatpush.msra.mxu0 0.0
    %965 = vmatpush.msra.mxu0 0.0
    %966 = vmatpush.msra.mxu0 %v821
    %967 = vmatpush.msra.mxu0 %v772
    %968 = vmatpush.msra.mxu0 %v756
    %969 = vmatmul.f32.gmra.mxu0 %v802
    %v970 = vpop.f32.mrf.mxu0
    %v971 = vadd.f32 0.0, %v970
    %972 = vdwg.mxu0
    %973 = vmatpush.msra.mxu0 0.0
    %974 = vmatpush.msra.mxu0 0.0
    %975 = vmatpush.msra.mxu0 0.0
    %976 = vmatpush.msra.mxu0 0.0
    %977 = vmatpush.msra.mxu0 0.0
    %978 = vmatpush.msra.mxu0 0.0
    %979 = vmatpush.msra.mxu0 0.0
    %980 = vmatpush.msra.mxu0 0.0
    %981 = vmatpush.msra.mxu0 0.0
    %982 = vmatpush.msra.mxu0 0.0
    %983 = vmatpush.msra.mxu0 0.0
    %984 = vmatpush.msra.mxu0 0.0
    %985 = vmatpush.msra.mxu0 0.0
    %986 = vmatpush.msra.mxu0 %v824
    %987 = vmatpush.msra.mxu0 %v773
    %988 = vmatpush.msra.mxu0 %v757
    %989 = vmatmul.f32.gmra.mxu0 %v802
    %v990 = vpop.f32.mrf.mxu0
    %v991 = vadd.f32 0.0, %v990
    %992 = vdwg.mxu0
    %993 = vmatpush.msra.mxu0 0.0
    %994 = vmatpush.msra.mxu0 0.0
    %995 = vmatpush.msra.mxu0 0.0
    %996 = vmatpush.msra.mxu0 0.0
    %997 = vmatpush.msra.mxu0 0.0
    %998 = vmatpush.msra.mxu0 0.0
    %999 = vmatpush.msra.mxu0 0.0
    %1000 = vmatpush.msra.mxu0 0.0
    %1001 = vmatpush.msra.mxu0 0.0
    %1002 = vmatpush.msra.mxu0 0.0
    %1003 = vmatpush.msra.mxu0 0.0
    %1004 = vmatpush.msra.mxu0 0.0
    %1005 = vmatpush.msra.mxu0 0.0
    %1006 = vmatpush.msra.mxu0 %v827
    %1007 = vmatpush.msra.mxu0 %v774
    %1008 = vmatpush.msra.mxu0 %v758
    %1009 = vmatmul.f32.gmra.mxu0 %v802
    %v1010 = vpop.f32.mrf.mxu0
    %v1011 = vadd.f32 0.0, %v1010
    %1012 = vdwg.mxu0
    %1013 = vmatpush.msra.mxu0 0.0
    %1014 = vmatpush.msra.mxu0 0.0
    %1015 = vmatpush.msra.mxu0 0.0
    %1016 = vmatpush.msra.mxu0 0.0
    %1017 = vmatpush.msra.mxu0 0.0
    %1018 = vmatpush.msra.mxu0 0.0
    %1019 = vmatpush.msra.mxu0 0.0
    %1020 = vmatpush.msra.mxu0 0.0
    %1021 = vmatpush.msra.mxu0 0.0
    %1022 = vmatpush.msra.mxu0 0.0
    %1023 = vmatpush.msra.mxu0 0.0
    %1024 = vmatpush.msra.mxu0 0.0
    %1025 = vmatpush.msra.mxu0 0.0
    %1026 = vmatpush.msra.mxu0 %v830
    %1027 = vmatpush.msra.mxu0 %v775
    %1028 = vmatpush.msra.mxu0 %v759
    %1029 = vmatmul.f32.gmra.mxu0 %v802
    %v1030 = vpop.f32.mrf.mxu0
    %v1031 = vadd.f32 0.0, %v1030
    %1032 = vdwg.mxu0
    %1033 = vmatpush.msra.mxu0 0.0
    %1034 = vmatpush.msra.mxu0 0.0
    %1035 = vmatpush.msra.mxu0 0.0
    %1036 = vmatpush.msra.mxu0 0.0
    %1037 = vmatpush.msra.mxu0 0.0
    %1038 = vmatpush.msra.mxu0 0.0
    %1039 = vmatpush.msra.mxu0 0.0
    %1040 = vmatpush.msra.mxu0 0.0
    %1041 = vmatpush.msra.mxu0 0.0
    %1042 = vmatpush.msra.mxu0 0.0
    %1043 = vmatpush.msra.mxu0 0.0
    %1044 = vmatpush.msra.mxu0 0.0
    %1045 = vmatpush.msra.mxu0 0.0
    %1046 = vmatpush.msra.mxu0 %v833
    %1047 = vmatpush.msra.mxu0 %v776
    %1048 = vmatpush.msra.mxu0 %v760
    %1049 = vmatmul.f32.gmra.mxu0 %v802
    %v1050 = vpop.f32.mrf.mxu0
    %v1051 = vadd.f32 0.0, %v1050
    %1052 = vdwg.mxu0
    %1053 = vmatpush.msra.mxu0 0.0
    %1054 = vmatpush.msra.mxu0 0.0
    %1055 = vmatpush.msra.mxu0 0.0
    %1056 = vmatpush.msra.mxu0 0.0
    %1057 = vmatpush.msra.mxu0 0.0
    %1058 = vmatpush.msra.mxu0 0.0
    %1059 = vmatpush.msra.mxu0 0.0
    %1060 = vmatpush.msra.mxu0 0.0
    %1061 = vmatpush.msra.mxu0 0.0
    %1062 = vmatpush.msra.mxu0 0.0
    %1063 = vmatpush.msra.mxu0 0.0
    %1064 = vmatpush.msra.mxu0 0.0
    %1065 = vmatpush.msra.mxu0 0.0
    %1066 = vmatpush.msra.mxu0 %v836
    %1067 = vmatpush.msra.mxu0 %v777
    %1068 = vmatpush.msra.mxu0 %v761
    %1069 = vmatmul.f32.gmra.mxu0 %v802
    %v1070 = vpop.f32.mrf.mxu0
    %v1071 = vadd.f32 0.0, %v1070
    %1072 = vdwg.mxu0
    %1073 = vmatpush.msra.mxu0 0.0
    %1074 = vmatpush.msra.mxu0 0.0
    %1075 = vmatpush.msra.mxu0 0.0
    %1076 = vmatpush.msra.mxu0 0.0
    %1077 = vmatpush.msra.mxu0 0.0
    %1078 = vmatpush.msra.mxu0 0.0
    %1079 = vmatpush.msra.mxu0 0.0
    %1080 = vmatpush.msra.mxu0 0.0
    %1081 = vmatpush.msra.mxu0 0.0
    %1082 = vmatpush.msra.mxu0 0.0
    %1083 = vmatpush.msra.mxu0 0.0
    %1084 = vmatpush.msra.mxu0 0.0
    %1085 = vmatpush.msra.mxu0 0.0
    %1086 = vmatpush.msra.mxu0 %v839
    %1087 = vmatpush.msra.mxu0 %v778
    %1088 = vmatpush.msra.mxu0 %v762
    %1089 = vmatmul.f32.gmra.mxu0 %v802
    %v1090 = vpop.f32.mrf.mxu0
    %v1091 = vadd.f32 0.0, %v1090
    %1092 = vdwg.mxu0
    %1093 = vmatpush.msra.mxu0 0.0
    %1094 = vmatpush.msra.mxu0 0.0
    %1095 = vmatpush.msra.mxu0 0.0
    %1096 = vmatpush.msra.mxu0 0.0
    %1097 = vmatpush.msra.mxu0 0.0
    %1098 = vmatpush.msra.mxu0 0.0
    %1099 = vmatpush.msra.mxu0 0.0
    %1100 = vmatpush.msra.mxu0 0.0
    %1101 = vmatpush.msra.mxu0 0.0
    %1102 = vmatpush.msra.mxu0 0.0
    %1103 = vmatpush.msra.mxu0 0.0
    %1104 = vmatpush.msra.mxu0 0.0
    %1105 = vmatpush.msra.mxu0 0.0
    %1106 = vmatpush.msra.mxu0 %v842
    %1107 = vmatpush.msra.mxu0 %v779
    %1108 = vmatpush.msra.mxu0 %v763
    %1109 = vmatmul.f32.gmra.mxu0 %v802
    %v1110 = vpop.f32.mrf.mxu0
    %v1111 = vadd.f32 0.0, %v1110
    %1112 = vdwg.mxu0
    %1113 = vmatpush.msra.mxu0 0.0
    %1114 = vmatpush.msra.mxu0 0.0
    %1115 = vmatpush.msra.mxu0 0.0
    %1116 = vmatpush.msra.mxu0 0.0
    %1117 = vmatpush.msra.mxu0 0.0
    %1118 = vmatpush.msra.mxu0 0.0
    %1119 = vmatpush.msra.mxu0 0.0
    %1120 = vmatpush.msra.mxu0 0.0
    %1121 = vmatpush.msra.mxu0 0.0
    %1122 = vmatpush.msra.mxu0 0.0
    %1123 = vmatpush.msra.mxu0 0.0
    %1124 = vmatpush.msra.mxu0 0.0
    %1125 = vmatpush.msra.mxu0 0.0
    %1126 = vmatpush.msra.mxu0 %v845
    %1127 = vmatpush.msra.mxu0 %v780
    %1128 = vmatpush.msra.mxu0 %v764
    %1129 = vmatmul.f32.gmra.mxu0 %v802
    %v1130 = vpop.f32.mrf.mxu0
    %v1131 = vadd.f32 0.0, %v1130
    %1132 = vdwg.mxu0
    %1133 = vmatpush.msra.mxu0 0.0
    %1134 = vmatpush.msra.mxu0 0.0
    %1135 = vmatpush.msra.mxu0 0.0
    %1136 = vmatpush.msra.mxu0 0.0
    %1137 = vmatpush.msra.mxu0 0.0
    %1138 = vmatpush.msra.mxu0 0.0
    %1139 = vmatpush.msra.mxu0 0.0
    %1140 = vmatpush.msra.mxu0 0.0
    %1141 = vmatpush.msra.mxu0 0.0
    %1142 = vmatpush.msra.mxu0 0.0
    %1143 = vmatpush.msra.mxu0 0.0
    %1144 = vmatpush.msra.mxu0 0.0
    %1145 = vmatpush.msra.mxu0 0.0
    %1146 = vmatpush.msra.mxu0 %v848
    %1147 = vmatpush.msra.mxu0 %v781
    %1148 = vmatpush.msra.mxu0 %v765
    %1149 = vmatmul.f32.gmra.mxu0 %v802
    %v1150 = vpop.f32.mrf.mxu0
    %v1151 = vadd.f32 0.0, %v1150
    %1152 = vdwg.mxu0
    %1153 = vmatpush.msra.mxu0 0.0
    %1154 = vmatpush.msra.mxu0 0.0
    %1155 = vmatpush.msra.mxu0 0.0
    %1156 = vmatpush.msra.mxu0 0.0
    %1157 = vmatpush.msra.mxu0 0.0
    %1158 = vmatpush.msra.mxu0 0.0
    %1159 = vmatpush.msra.mxu0 0.0
    %1160 = vmatpush.msra.mxu0 0.0
    %1161 = vmatpush.msra.mxu0 0.0
    %1162 = vmatpush.msra.mxu0 0.0
    %1163 = vmatpush.msra.mxu0 0.0
    %1164 = vmatpush.msra.mxu0 0.0
    %1165 = vmatpush.msra.mxu0 0.0
    %1166 = vmatpush.msra.mxu0 %v851
    %1167 = vmatpush.msra.mxu0 %v782
    %1168 = vmatpush.msra.mxu0 %v766
    %1169 = vmatmul.f32.gmra.mxu0 %v802
    %v1170 = vpop.f32.mrf.mxu0
    %v1171 = vadd.f32 0.0, %v1170
    %1172 = vdwg.mxu0
    %v1173 = vadd.f32 %v871, %v891
    %v1174 = vadd.f32 %v911, %v931
    %v1175 = vadd.f32 %v951, %v971
    %v1176 = vadd.f32 %v991, %v1011
    %v1177 = vadd.f32 %v1031, %v1051
    %v1178 = vadd.f32 %v1071, %v1091
    %v1179 = vadd.f32 %v1111, %v1131
    %v1180 = vadd.f32 %v1151, %v1171
    %v1181 = vadd.f32 %v1173, %v1174
    %v1182 = vadd.f32 %v1175, %v1176
    %v1183 = vadd.f32 %v1177, %v1178
    %v1184 = vadd.f32 %v1179, %v1180
    %v1185 = vadd.f32 %v1181, %v1182
    %v1186 = vadd.f32 %v1183, %v1184
    %v1187 = vadd.f32 %v1185, %v1186
    %s1188 = sld [smem:[#allocation2]]
    %s1189 = smul.f32 %s1188, 16.0
    %v1190 = vstv %s1189
    %v1191 = vadd.f32 %v1187, %v1190
    %1192 = vst [vmem:[#allocation3] sm:$0x1] %v1191
    // Predicated region
    $region30: #{tpu_custom_call.1} parent=1 // pred_check
      _
    $region31: #{tpu_custom_call.1} parent=1 // pred_check_branch
      %1194 = sbr.rel (0) target = $region33
    $region32: #{tpu_custom_call.1} parent=1 // pred_region
      %1196 = vsyncadd [#allocation4], 0
      %s1198 = sshll.u32 [#allocation3], 4
      %s1199 = int_to_ptr.vmem [resolvable:$true] %s1198
      %s1200 = sshll.u32 %s7, 4
      %s1201 = int_to_ptr.hbm [resolvable:$true] %s1200
      %1203 = dma.vmem_to_hbm [thread:$0]  %s1199, 16, %s1201, [#allocation4]
    $region33: #{tpu_custom_call.1} parent=1 // pred_fallthru
      _
    // Predicated region
    $region34: #{tpu_custom_call.1} parent=1 // pred_check
      _
    $region35: #{tpu_custom_call.1} parent=1 // pred_check_branch
      %1205 = sbr.rel (0) target = $region37
    $region36: #{tpu_custom_call.1} parent=1 // pred_region
      %1207 = dma.done [#allocation4], 16
    $region37: #{tpu_custom_call.1} parent=1 // pred_fallthru
      _
    %1208 = vsyncpa [#allocation4], 1

</llo_original>
